<compile_context>
chip_gen: v5e
topology: v5e:2x2
jax: 0.10.0
libtpu: 0.0.40
codegen_flags: <defaults>
</compile_context>

<pallas_src>
import functools

import jax
import jax.numpy as jnp
from jax.experimental import pallas as pl
from jax.experimental.pallas import tpu as pltpu


def _round_up(x, m):
    return ((x + m - 1) // m) * m


def _vmem_budgets():
    """(tile_budget_bytes, vmem_limit_bytes) per TPU generation.

    tile_budget bounds the double-buffered output block; vmem_limit is the
    scoped-VMEM limit requested from the compiler. Falls back to v7x-safe
    values if the hardware query is unavailable."""
    cap = 64 * 1024 * 1024
    try:
        info = pltpu.get_tpu_info()
        cap = int(getattr(info, "vmem_capacity_bytes", cap))
    except Exception:
        pass
    if cap >= 128 * 1024 * 1024:          # v5e / v6e: 128 MiB physical VMEM
        return 48 * 1024 * 1024, 80 * 1024 * 1024
    return 20 * 1024 * 1024, 44 * 1024 * 1024   # v7x-class: 64 MiB per TC


def _choose_gather_tile(n_tok, d_model, itemsize, tile_budget):
    sub = max(8, 32 // max(itemsize, 1))          # sublane granule (8 f32 / 16 bf16 / 32 i8)
    per_row = max(1, d_model * itemsize)
    cap = max(sub, tile_budget // (2 * per_row))  # only the double-buffered out block now
    tile = min(4096, cap, _round_up(max(n_tok, 1), sub))
    tile = max(sub, (tile // sub) * sub)
    return int(tile)


def _choose_fast_tile(n_tok, d_model, vocab, itemsize, tile_budget):
    sub = max(8, 32 // max(itemsize, 1))
    out_cap = max(sub, tile_budget // max(1, 2 * d_model * itemsize))
    hot_cap = max(sub, (4 << 20) // max(1, vocab * 4))   # keep the one-hot <= ~4 MiB f32
    tile = min(512, out_cap, hot_cap, _round_up(max(n_tok, 1), sub))
    tile = max(sub, (tile // sub) * sub)
    return int(tile)


# ---------------------------------------------------------------------------
# Fast path: small vocab -> VMEM-resident table + one-hot matmul on the MXU.
# ---------------------------------------------------------------------------
def _embed_onehot_kernel(ids_ref, table_ref, out_ref, *, scale, vocab_size):
    ids = ids_ref[...]                                           # (tok_tile, 1) int32
    tok_tile = ids.shape[0]
    iota = jax.lax.broadcasted_iota(jnp.int32, (tok_tile, vocab_size), 1)
    one_hot = (ids == iota).astype(table_ref.dtype)              # (tok_tile, vocab)
    emb = jnp.dot(one_hot, table_ref[...], preferred_element_type=jnp.float32)
    out_ref[...] = (emb * scale).astype(out_ref.dtype)


def _onehot_call(ids_2d, table, *, tok_tile, vmem_limit):
    n_pad = ids_2d.shape[0]
    vocab, d_model = table.shape
    scale = float(d_model) ** 0.5
    kernel = functools.partial(_embed_onehot_kernel, scale=scale, vocab_size=vocab)
    return pl.pallas_call(
        kernel,
        out_shape=jax.ShapeDtypeStruct((n_pad, d_model), table.dtype),
        grid_spec=pltpu.PrefetchScalarGridSpec(
            num_scalar_prefetch=0,
            grid=(n_pad // tok_tile,),
            in_specs=[
                pl.BlockSpec((tok_tile, 1), lambda i: (i, 0)),       # ids tile
                pl.BlockSpec((vocab, d_model), lambda i: (0, 0)),    # table, VMEM-resident
            ],
            out_specs=pl.BlockSpec((tok_tile, d_model), lambda i: (i, 0)),
        ),
        compiler_params=pltpu.CompilerParams(
            dimension_semantics=("parallel",),
            vmem_limit_bytes=vmem_limit,
        ),
    )(ids_2d, table)


# ---------------------------------------------------------------------------
# General path: HBM-resident table + manual per-row DMA gather ring.
# ---------------------------------------------------------------------------
def _embed_gather_kernel(ids_ref, table_hbm, out_ref, sems, *,
                         scale, tok_tile, n_inflight):
    """One grid step: gather tok_tile rows from the HBM table straight into the
    pipelined (tok_tile, d_model) output block using a ring of n_inflight
    outstanding DMAs, then apply the sqrt(d_model) scale in place."""
    base = pl.program_id(0) * tok_tile

    def start_row(row, tok):
        pltpu.make_async_copy(
            table_hbm.at[tok],                 # one HBM table row (data-dependent)
            out_ref.at[row],                   # its destination row in the output block
            sems.at[row % n_inflight],
        ).start()

    def wait_row(row):
        # The wait descriptor only needs the same shape/byte count as the
        # started copy (dst pins it); the src row index is irrelevant here.
        pltpu.make_async_copy(
            table_hbm.at[0],
            out_ref.at[row],
            sems.at[row % n_inflight],
        ).wait()

    # Prime the ring — fully unrolled at trace time so the LLO scheduler can
    # co-issue the initial descriptors.
    for r in range(n_inflight):
        start_row(r, ids_ref[base + r])

    # Steady state: hoist the SMEM id read for row r+n_inflight BEFORE the
    # wait (a .wait() breaks SMEM sst->sld forwarding), then wait row r and
    # immediately refill its semaphore slot with row r+n_inflight.
    steady = tok_tile - n_inflight

    @pl.loop(0, steady)
    def _(r):
        nxt = r + n_inflight
        tok_next = ids_ref[base + nxt]
        wait_row(r)
        start_row(nxt, tok_next)

    # Drain the last n_inflight rows.
    @pl.loop(steady, tok_tile)
    def _(r):
        wait_row(r)

    # All rows resident in the output block: scale in place (free VPU work
    # under the DMA-bound regime). Pallas pipelines the HBM writeback.
    out_ref[...] = out_ref[...] * scale


def _gather_call(flat_ids, table, *, tok_tile, n_inflight, vmem_limit):
    n_pad, = flat_ids.shape                       # multiple of tok_tile
    vocab, d_model = table.shape
    scale = float(d_model) ** 0.5
    kernel = functools.partial(
        _embed_gather_kernel, scale=scale, tok_tile=tok_tile, n_inflight=n_inflight)
    return pl.pallas_call(
        kernel,
        out_shape=jax.ShapeDtypeStruct((n_pad, d_model), table.dtype),
        grid_spec=pltpu.PrefetchScalarGridSpec(
            num_scalar_prefetch=1,                # flat ids -> SMEM, drive the gather
            grid=(n_pad // tok_tile,),
            in_specs=[
                pl.BlockSpec(memory_space=pl.ANY),   # table stays in HBM, manual DMA
            ],
            out_specs=pl.BlockSpec((tok_tile, d_model), lambda i, ids: (i, 0)),
            scratch_shapes=[
                pltpu.SemaphoreType.DMA((n_inflight,)),   # DMA ring (no VMEM row_buf)
            ],
        ),
        compiler_params=pltpu.CompilerParams(
            dimension_semantics=("parallel",),    # disjoint output tiles
            vmem_limit_bytes=vmem_limit,
        ),
    )(flat_ids, table)


# ---------------------------------------------------------------------------
# Wrapper (dispatch, padding, reshaping).
# ---------------------------------------------------------------------------
def embedder_forward(x, embedding_table, *, tok_tile=None, n_inflight=48,
                     max_tokens_per_call=131072):
    """x: (...,) int ids, embedding_table: (vocab, d_model) -> (..., d_model)."""
    orig_shape = tuple(x.shape)
    vocab, d_model = embedding_table.shape
    itemsize = embedding_table.dtype.itemsize
    flat = x.reshape(-1).astype(jnp.int32)
    n_tok = int(flat.shape[0])

    tile_budget, vmem_limit = _vmem_budgets()
    table_bytes = vocab * d_model * itemsize
    use_onehot = (vocab <= 2048) and (table_bytes <= min(4 << 20, tile_budget // 4))

    if use_onehot:
        tile = int(tok_tile) if tok_tile else _choose_fast_tile(
            n_tok, d_model, vocab, itemsize, tile_budget)
        n_pad = _round_up(max(n_tok, 1), tile)
        ids = flat
        if n_pad != n_tok:
            ids = jnp.pad(ids, (0, n_pad - n_tok))      # token 0 is a valid row
        out = _onehot_call(ids.reshape(n_pad, 1), embedding_table,
                           tok_tile=tile, vmem_limit=vmem_limit)
        out_flat = out[:n_tok]
    else:
        tile = int(tok_tile) if tok_tile else _choose_gather_tile(
            n_tok, d_model, itemsize, tile_budget)
        n_inflight = max(1, min(int(n_inflight), tile))
        # The scalar-prefetched ids live in SMEM (1D pads to next_pow2(4N) B);
        # 128K ids (512 KiB) leaves ample SMEM headroom. The chunk fallback
        # only triggers for >128K tokens per call.
        outs = []
        for start in range(0, max(n_tok, 1), max_tokens_per_call):
            chunk = flat[start:start + max_tokens_per_call]
            n_chunk = int(chunk.shape[0])
            n_pad = _round_up(n_chunk, tile)
            if n_pad != n_chunk:
                chunk = jnp.pad(chunk, (0, n_pad - n_chunk))
            out = _gather_call(chunk, embedding_table, tok_tile=tile,
                               n_inflight=n_inflight, vmem_limit=vmem_limit)
            outs.append(out[:n_chunk])
        out_flat = outs[0] if len(outs) == 1 else jnp.concatenate(outs, axis=0)

    return out_flat.reshape(*orig_shape, d_model)


if __name__ == "__main__":
    key = jax.random.PRNGKey(0)
    k1, k2, k3, k4 = jax.random.split(key, 4)

    # 1) Small-vocab fast path (one-hot MXU): Embedder(vocab=16, d_model=32), x (2, 8).
    vocab1, d1, B1, S1 = 16, 32, 2, 8
    table1 = jax.random.normal(k1, (vocab1, d1), dtype=jnp.float32)
    x1 = jax.random.randint(k2, (B1, S1), 0, vocab1, dtype=jnp.int32)
    out1 = jax.block_until_ready(embedder_forward(x1, table1))
    ref1 = jnp.take(table1, x1, axis=0) * (d1 ** 0.5)
    assert out1.shape == (B1, S1, d1)
    assert jnp.allclose(out1, ref1, atol=1e-5, rtol=1e-5)

    # 2) Larger vocab -> HBM DMA-gather ring path: vocab=4096, d_model=128, x (2, 64).
    vocab2, d2, B2, S2 = 4096, 128, 2, 64
    table2 = jax.random.normal(k3, (vocab2, d2), dtype=jnp.float32)
    x2 = jax.random.randint(k4, (B2, S2), 0, vocab2, dtype=jnp.int32)
    out2 = jax.block_until_ready(embedder_forward(x2, table2))
    ref2 = jnp.take(table2, x2, axis=0) * (d2 ** 0.5)
    assert out2.shape == (B2, S2, d2)
    assert jnp.allclose(out2, ref2, atol=1e-5, rtol=1e-5)

    print("KERNEL_OK")
</pallas_src>

<mosaic_0001>
module attributes {stable_mosaic.version = 11 : i64} {
  func.func @_embed_onehot_kernel(%arg0: i32, %arg1: memref<16x1xi32, #tpu.memory_space<vmem>>, %arg2: memref<16x32xf32, #tpu.memory_space<vmem>>, %arg3: memref<16x32xf32, #tpu.memory_space<vmem>>) attributes {dimension_semantics = [#tpu.dimension_semantics<parallel>], iteration_bounds = array<i64: 1>, scalar_prefetch = 0 : i64, scratch_operands = 0 : i64, tpu.core_type = #tpu.core_type<tc>, window_params = [{transform_indices = @transform_0, window_bounds = array<i64: 16, 1>}, {pipeline_mode = #tpu.pipeline_mode<synchronous>, transform_indices = @transform_1, window_bounds = array<i64: 16, 32>}, {transform_indices = @transform_2, window_bounds = array<i64: 16, 32>}]} {
    %c0 = arith.constant 0 : index
    %c0_0 = arith.constant 0 : index
    %0 = vector.load %arg1[%c0, %c0_0] : memref<16x1xi32, #tpu.memory_space<vmem>>, vector<16x1xi32>
    %1 = tpu.iota {dimensions = array<i32: 1>} : vector<16x16xi32>
    %2 = vector.broadcast %0 : vector<16x1xi32> to vector<16x16xi32>
    %3 = arith.cmpi eq, %2, %1 : vector<16x16xi32>
    %4 = arith.extui %3 : vector<16x16xi1> to vector<16x16xi32>
    %5 = arith.sitofp %4 : vector<16x16xi32> to vector<16x16xf32>
    %c0_1 = arith.constant 0 : index
    %c0_2 = arith.constant 0 : index
    %6 = vector.load %arg2[%c0_1, %c0_2] : memref<16x32xf32, #tpu.memory_space<vmem>>, vector<16x32xf32>
    %cst = arith.constant dense<0.000000e+00> : vector<16x32xf32>
    %7 = tpu.matmul %5, %6, %cst {dimension_numbers = #tpu.dot_dimension_numbers<[1], [0], [0], [1], [0, 0, 1, 1], [], []>} : vector<16x16xf32>, vector<16x32xf32>, vector<16x32xf32> -> vector<16x32xf32>
    %cst_3 = arith.constant 5.65685415 : f32
    %8 = vector.broadcast %cst_3 : f32 to vector<16x32xf32>
    %9 = arith.mulf %7, %8 : vector<16x32xf32>
    %c0_4 = arith.constant 0 : index
    %c0_5 = arith.constant 0 : index
    %10 = vector.load %arg3[%c0_4, %c0_5] : memref<16x32xf32, #tpu.memory_space<vmem>>, vector<16x32xf32>
    tpu.vector_store %arg3[%c0_4, %c0_5], %9 {strides = array<i32>} : memref<16x32xf32, #tpu.memory_space<vmem>>, vector<16x32xf32>,
    return
  }
  func.func @transform_0(%arg0: i32) -> (i32, i32) {
    %c0_i32 = arith.constant 0 : i32
    %c0_i32_0 = arith.constant 0 : i32
    return %arg0, %c0_i32 : i32, i32
  }
  func.func @transform_1(%arg0: i32) -> (i32, i32) {
    %c0_i32 = arith.constant 0 : i32
    %c0_i32_0 = arith.constant 0 : i32
    %c0_i32_1 = arith.constant 0 : i32
    return %c0_i32, %c0_i32_0 : i32, i32
  }
  func.func @transform_2(%arg0: i32) -> (i32, i32) {
    %c0_i32 = arith.constant 0 : i32
    %c0_i32_0 = arith.constant 0 : i32
    return %arg0, %c0_i32 : i32, i32
  }
}

</mosaic_0001>

<llo_original>
// kernel: tpu_custom_call.1
$region0: #{tpu_custom_call.1}
  #allocation0 [shape = 'u32[]', space=smem, size = 0x4, offset = 0x4, fixed_abs, tag = 'smem constant byte address 0x4 - core index']
  #allocation1 [shape = 'u32[72,128]{1,0:T(1,128)}', space=vmem, size = 0x9000, scoped, tag = 'internal scratch']
  %s0 = inlined_call_operand.vmem [shape: s32[16,1], index: 0, kind: input, shape index: {}]
  %s1 = inlined_call_operand.vmem [shape: f32[16,32], index: 1, kind: input, shape index: {}]
  %s2 = inlined_call_operand.hbm [shape: f32[16,32], index: 2, kind: output, shape index: {}]
  %s3 = sld [smem:[#allocation0]]
  $region18: #{tpu_custom_call.1} parent=0
    _
  %s5 = ssub.s32 1, %s3
  %s6 = scalar_select 0, %s5, %s3
  $region1: #{tpu_custom_call.1} parent=0
    #allocation2 [shape = 'u8[8192]{0}', space=vmem, size = 0x2000, scoped, tag = 'output window, operand 0, single buffered']
    #allocation3 [shape = 's32[1]{0}', space=sflag, size = 0x4, scoped, tag = 'scoped memory for tpu_custom_call.1']
    %7 = vsyncpa [#allocation3], 0
    // Predicated region
    $region2: #{tpu_custom_call.1} parent=1 // pred_check
      _
    $region3: #{tpu_custom_call.1} parent=1 // pred_check_branch
      %9 = sbr.rel (0) target = $region5
    $region4: #{tpu_custom_call.1} parent=1 // pred_region
      _
    $region5: #{tpu_custom_call.1} parent=1 // pred_fallthru
      _
    // Predicated region
    $region6: #{tpu_custom_call.1} parent=1 // pred_check
      _
    $region7: #{tpu_custom_call.1} parent=1 // pred_check_branch
      %11 = sbr.rel (0) target = $region9
    $region8: #{tpu_custom_call.1} parent=1 // pred_region
      _
    $region9: #{tpu_custom_call.1} parent=1 // pred_fallthru
      _
    %v12 = vld [vmem:[%s0] sm:$0xff]
    %v13 = vld [vmem:[%s0 + $0x8] sm:$0xff]
    %v14 = vlaneseq
    %v15 = vand.u32 %v14, 127
    %16 = vset.pattern.permute.xlu0 0
    %17 = vperm.xlu0 %16, %v12
    %v18 = vpop.permute.xlu0 %17
    %19 = vset.pattern.permute.xlu0 0
    %20 = vperm.xlu0 %19, %v13
    %v21 = vpop.permute.xlu0 %20
    %vm22 = vcmp.eq.s32.totalorder %v18, %v15
    %vm23 = vcmp.eq.s32.totalorder %v21, %v15
    %v24 = vsel %vm22, 1, 0
    %v25 = vsel %vm23, 1, 0
    %v26 = vcvt.s32.f32 %v24
    %v27 = vcvt.s32.f32 %v25
    %v28 = vld [vmem:[%s1] sm:$0xff]
    %v29 = vld [vmem:[%s1 + $0x8] sm:$0xff]
    %vm30 = vcmask 130048
    %v32 = vsel %vm30, %v26, 0
    %v35 = vsel %vm30, %v27, 0
    %37 = vmatpush.msra.mxu0 0.0
    %38 = vmatpush.msra.mxu0 0.0
    %39 = vmatpush.msra.mxu0 0.0
    %40 = vmatpush.msra.mxu0 0.0
    %41 = vmatpush.msra.mxu0 0.0
    %42 = vmatpush.msra.mxu0 0.0
    %43 = vmatpush.msra.mxu0 0.0
    %44 = vmatpush.msra.mxu0 0.0
    %45 = vmatpush.msra.mxu0 0.0
    %46 = vmatpush.msra.mxu0 0.0
    %47 = vmatpush.msra.mxu0 0.0
    %48 = vmatpush.msra.mxu0 0.0
    %49 = vmatpush.msra.mxu0 0.0
    %50 = vmatpush.msra.mxu0 0.0
    %51 = vmatpush.msra.mxu0 %v29
    %52 = vmatpush.msra.mxu0 %v28
    %53 = vmatmul.f32.gmra.mxu0 %v32
    %v54 = vpop.f32.mrf.mxu0
    %v55 = vadd.f32 0.0, %v54
    %56 = vmatmul.f32.gmra.mxu0 %v35
    %v57 = vpop.f32.mrf.mxu0
    %v58 = vadd.f32 0.0, %v57
    %59 = vdwg.mxu0
    %v60 = vmul.f32 %v55, 5.656854
    %v61 = vmul.f32 %v58, 5.656854
    %vm62 = vcmask 261120
    %63 = vst.msk [vmem:[#allocation2] sm:$0xff] %vm62, %v60
    %64 = vst.msk [vmem:[#allocation2 + $0x8] sm:$0xff] %vm62, %v61
    // Predicated region
    $region10: #{tpu_custom_call.1} parent=1 // pred_check
      _
    $region11: #{tpu_custom_call.1} parent=1 // pred_check_branch
      %66 = sbr.rel (0) target = $region13
    $region12: #{tpu_custom_call.1} parent=1 // pred_region
      %68 = vsyncadd [#allocation3], 0
      %s69 = sshll.u32 [#allocation2], 4
      %s70 = int_to_ptr.vmem [resolvable:$true] %s69
      %s71 = sshll.u32 %s2, 4
      %s72 = int_to_ptr.hbm [resolvable:$true] %s71
      %77 = dma.vmem_to_hbm [thread:$0]  %s70, 256, %s72, [#allocation3], 128, 128, 8
    $region13: #{tpu_custom_call.1} parent=1 // pred_fallthru
      _
    // Predicated region
    $region14: #{tpu_custom_call.1} parent=1 // pred_check
      _
    $region15: #{tpu_custom_call.1} parent=1 // pred_check_branch
      %79 = sbr.rel (0) target = $region17
    $region16: #{tpu_custom_call.1} parent=1 // pred_region
      %81 = dma.done [#allocation3], 256
    $region17: #{tpu_custom_call.1} parent=1 // pred_fallthru
      _
    %82 = vsyncpa [#allocation3], 1

</llo_original>
